<compile_context>
chip_gen: v7x
topology: tpu7x:2x2x1
jax: 0.10.0
libtpu: 0.0.40
codegen_flags: <defaults>
</compile_context>

<pallas_src>
import jax
import jax.numpy as jnp
from jax import lax
from jax.experimental import pallas as pl
from jax.experimental.pallas import tpu as pltpu


# ---------------------------------------------------------------------------
# Generation-aware sizing helpers
# ---------------------------------------------------------------------------
def _vmem_budget_bytes():
    """~80% of physical VMEM: ≈102 MiB on v5e/v6e (128 MiB), ≈51 MiB on v7x (64 MiB)."""
    cap = 64 * 1024 * 1024  # conservative fallback if the query is unavailable
    try:
        cap = int(pltpu.get_tpu_info().vmem_capacity_bytes)
    except Exception:
        pass
    return int(cap * 0.8)


def _default_b_tile():
    """Recurrence batch tile: 256 fills the 256-wide MXU on v6e/v7x; v5e's MXU is
    128-wide so 128 is already matched (and halves VMEM pressure there)."""
    try:
        kind = jax.devices()[0].device_kind.lower()
        if "v5" in kind:
            return 128
    except Exception:
        pass
    return 256


def _tile(dim, target, quantum=8):
    """Largest divisor of `dim` that is <= target and a multiple of `quantum`,
    falling back to `dim` itself (block == full array dim is always legal)."""
    target = max(int(target), quantum)
    if dim <= target:
        return dim
    t = (target // quantum) * quantum
    while t >= quantum:
        if dim % t == 0:
            return t
        t -= quantum
    return dim


def _sigmoid(x):
    # tanh form: one EUP push per element instead of exp + divide.
    return 0.5 * jnp.tanh(0.5 * x) + 0.5


# ---------------------------------------------------------------------------
# Kernel 1: hoisted input projection  Y = X @ W + b  (one big MXU matmul)
# ---------------------------------------------------------------------------
def proj_kernel(x_ref, w_ref, b_ref, y_ref):
    y = jnp.dot(x_ref[...], w_ref[...], preferred_element_type=jnp.float32) + b_ref[...]
    y_ref[...] = y.astype(y_ref.dtype)


def _project(x2d, w, b, *, out_dtype, budget):
    rows, k = x2d.shape
    n = w.shape[1]
    out_bytes = jnp.dtype(out_dtype).itemsize
    # Double-buffered input + output row blocks should fit in ~half the budget;
    # target 512-1024 rows (mem-bound matmul roofline peaks there).
    per_row = 2 * (k * 4 + n * out_bytes)
    cap = max(8, (budget // 2) // max(per_row, 1))
    tm = _tile(rows, min(1024, cap))
    return pl.pallas_call(
        proj_kernel,
        out_shape=jax.ShapeDtypeStruct((rows, n), out_dtype),
        grid_spec=pltpu.PrefetchScalarGridSpec(
            num_scalar_prefetch=0,
            grid=(rows // tm,),
            in_specs=[
                pl.BlockSpec((tm, k), lambda i: (i, 0)),
                # Weights/bias resident in VMEM (whole array, single buffer).
                pl.BlockSpec(memory_space=pltpu.MemorySpace.VMEM),
                pl.BlockSpec(memory_space=pltpu.MemorySpace.VMEM),
            ],
            out_specs=pl.BlockSpec((tm, n), lambda i: (i, 0)),
        ),
        compiler_params=pltpu.CompilerParams(
            dimension_semantics=("parallel",),
            vmem_limit_bytes=budget),
    )(x2d, w, b)


# ---------------------------------------------------------------------------
# Kernel 2: one LSTM layer's recurrence (input projection already applied).
# Time-major blocks: g_ref[i] / hseq_ref[i] are dense [TB, *] slabs per step.
# grid = (batch tiles [parallel], time tiles [arbitrary/sequential]).
# ---------------------------------------------------------------------------
def lstm_layer_kernel(g_ref, len_ref, whh_ref, hseq_ref, hlast_ref, h_sc, c_sc):
    t = pl.program_id(1)
    TT = g_ref.shape[0]
    H = h_sc.shape[1]

    @pl.when(t == 0)
    def _():
        h_sc[...] = jnp.zeros_like(h_sc)
        c_sc[...] = jnp.zeros_like(c_sc)

    lens = len_ref[...]            # [TB, 1] int32
    whh = whh_ref[...]             # [H, 4H] f32, resident in VMEM
    t0 = t * TT

    def step(i, carry):
        h, c = carry
        # PyTorch gate order: i, f, g, o. Input projection was hoisted; only the
        # recurrent [TB,H]@[H,4H] matmul sits on the serial critical path.
        g = g_ref[i].astype(jnp.float32) + jnp.dot(
            h, whh, preferred_element_type=jnp.float32)
        i_g = _sigmoid(g[:, 0:H])
        f_g = _sigmoid(g[:, H:2 * H])
        g_g = jnp.tanh(g[:, 2 * H:3 * H])
        o_g = _sigmoid(g[:, 3 * H:4 * H])
        c_new = f_g * c + i_g * g_g
        h_new = o_g * jnp.tanh(c_new)

        valid = lens > (t0 + i)    # [TB, 1]: timestep inside this sequence?
        h = jnp.where(valid, h_new, h)
        c = jnp.where(valid, c_new, c)
        # pad_packed_sequence zero-pads outputs past each sequence's length.
        hseq_ref[i] = jnp.where(valid, h_new, 0.0)
        return h, c

    h, c = lax.fori_loop(0, TT, step, (h_sc[...], c_sc[...]), unroll=True)
    h_sc[...] = h
    c_sc[...] = c

    @pl.when(t == pl.num_programs(1) - 1)
    def _():
        # hidden of the packed LSTM = state at the last valid timestep (frozen after).
        hlast_ref[...] = h


def _lstm_layer(gates_tm, len2d, whh, *, budget, b_tile):
    T, B, G4 = gates_tm.shape
    H = G4 // 4
    TB = _tile(B, b_tile)
    gate_bytes = jnp.dtype(gates_tm.dtype).itemsize
    # Per-timestep double-buffered traffic: gates block + hseq block.
    per_t = 2 * TB * (G4 * gate_bytes + H * 4)
    fixed = H * G4 * 4 + 4 * TB * H * 4          # resident whh + scratch/hlast
    cap_t = max(1, int((budget * 0.6 - fixed) // max(per_t, 1)))
    TT = _tile(T, min(32, cap_t), quantum=1)
    return pl.pallas_call(
        lstm_layer_kernel,
        out_shape=(jax.ShapeDtypeStruct((T, B, H), jnp.float32),
                   jax.ShapeDtypeStruct((B, H), jnp.float32)),
        grid_spec=pltpu.PrefetchScalarGridSpec(
            num_scalar_prefetch=0,
            grid=(B // TB, T // TT),
            in_specs=[
                pl.BlockSpec((TT, TB, G4), lambda b, t: (t, b, 0)),
                pl.BlockSpec((TB, 1), lambda b, t: (b, 0)),
                # Recurrent weights resident in VMEM (single buffer).
                pl.BlockSpec(memory_space=pltpu.MemorySpace.VMEM),
            ],
            out_specs=[
                pl.BlockSpec((TT, TB, H), lambda b, t: (t, b, 0)),
                pl.BlockSpec((TB, H), lambda b, t: (b, 0)),
            ],
            scratch_shapes=[pltpu.VMEM((TB, H), jnp.float32),
                            pltpu.VMEM((TB, H), jnp.float32)],
        ),
        compiler_params=pltpu.CompilerParams(
            dimension_semantics=("parallel", "arbitrary"),
            vmem_limit_bytes=budget),
    )(gates_tm, len2d, whh)


# ---------------------------------------------------------------------------
# Kernel 3: SoftDotAttention + final Linear, gridded over batch tiles.
# ctx arrives time-major [T, TB, H]; scores / weighted-context use the VPU/XLU
# (degenerate M=1/N=1 MXU contractions dropped); dense matmuls stay on the MXU.
# ---------------------------------------------------------------------------
def atten_kernel(h_ref, ctx_ref, len_ref, w_in_ref, w_out_a_ref, w_out_b_ref,
                 w_lin_ref, b_lin_ref, out_ref):
    h = h_ref[...]                              # [TB, H]
    ctx = ctx_ref[...]                          # [T, TB, H] (time-major)

    target = jnp.dot(h, w_in_ref[...], preferred_element_type=jnp.float32)   # [TB, H]

    # s[t, b] = sum_h ctx[t, b, h] * target[b, h]   (VPU mult + cross-lane reduce)
    s = jnp.sum(ctx * target[None, :, :], axis=2)                            # [T, TB]

    t_idx = jax.lax.broadcasted_iota(jnp.int32, s.shape, 0)
    # Large finite negative instead of -inf: avoids NaN for all-masked rows.
    s = jnp.where(t_idx >= len_ref[...], -1e30, s)

    s = s - jnp.max(s, axis=0, keepdims=True)
    e = jnp.exp(s)
    p = e / jnp.sum(e, axis=0, keepdims=True)    # softmax over the seq dim

    # Weighted context: cheap vreg accumulation over the leading (time) dim.
    weighted = jnp.sum(p[:, :, None] * ctx, axis=0)                          # [TB, H]

    h_tilde = jnp.tanh(
        jnp.dot(weighted, w_out_a_ref[...], preferred_element_type=jnp.float32)
        + jnp.dot(h, w_out_b_ref[...], preferred_element_type=jnp.float32))
    out_ref[...] = (jnp.dot(h_tilde, w_lin_ref[...], preferred_element_type=jnp.float32)
                    + b_lin_ref[...])


def _atten_classify(hidden, ctx_tm, len_row, w_in, w_out_a, w_out_b, w_lin, b_lin,
                    *, budget):
    T, B, H = ctx_tm.shape
    O = w_lin.shape[1]
    # ctx block [T, TB, H] (double-buffered) dominates; keep it within ~half the budget.
    # TODO(synk): for very large T*H, tile T with a flash-style online softmax instead.
    weights_bytes = (3 * H * H + H * O + O) * 4
    per_b = 2 * T * H * 4 + 4 * H * 4
    cap_b = max(8, int((budget // 2 - weights_bytes) // max(per_b, 1)))
    TB = _tile(B, min(256, cap_b), quantum=128)   # quantum 128 keeps the (1,TB) len block legal
    return pl.pallas_call(
        atten_kernel,
        out_shape=jax.ShapeDtypeStruct((B, O), jnp.float32),
        grid_spec=pltpu.PrefetchScalarGridSpec(
            num_scalar_prefetch=0,
            grid=(B // TB,),
            in_specs=[
                pl.BlockSpec((TB, H), lambda i: (i, 0)),
                pl.BlockSpec((T, TB, H), lambda i: (0, i, 0)),
                pl.BlockSpec((1, TB), lambda i: (0, i)),
                pl.BlockSpec(memory_space=pltpu.MemorySpace.VMEM),
                pl.BlockSpec(memory_space=pltpu.MemorySpace.VMEM),
                pl.BlockSpec(memory_space=pltpu.MemorySpace.VMEM),
                pl.BlockSpec(memory_space=pltpu.MemorySpace.VMEM),
                pl.BlockSpec(memory_space=pltpu.MemorySpace.VMEM),
            ],
            out_specs=pl.BlockSpec((TB, O), lambda i: (i, 0)),
        ),
        compiler_params=pltpu.CompilerParams(
            dimension_semantics=("parallel",),
            vmem_limit_bytes=budget),
    )(hidden, ctx_tm, len_row, w_in, w_out_a, w_out_b, w_lin, b_lin)


# ---------------------------------------------------------------------------
# Forward pass
# ---------------------------------------------------------------------------
def lstm_classification_forward(inputs, lengths, params, *, gates_dtype=jnp.bfloat16):
    B, T, D = inputs.shape
    H = params["whh_l0"].shape[1]
    budget = _vmem_budget_bytes()
    b_tile = _default_b_tile()

    # One-time time-major transpose of the narrow (D-wide) raw input only. Everything
    # downstream stays time-major [T, B, *]: gates are emitted time-major by the
    # projection, the recurrence reads/writes dense [TB, *] slabs per timestep, and
    # the layer-1 projection input (h0_seq) is already time-major (no more transposes).
    x_tm = jnp.swapaxes(inputs.astype(jnp.float32), 0, 1)        # [T, B, D]
    len2d = lengths.astype(jnp.int32).reshape(B, 1)
    len_row = lengths.astype(jnp.int32).reshape(1, B)

    wih0 = params["wih_l0"].T                                    # [D, 4H]
    whh0 = params["whh_l0"].T                                    # [H, 4H]
    b0 = (params["bih_l0"] + params["bhh_l0"]).reshape(1, 4 * H)
    wih1 = params["wih_l1"].T                                    # [H, 4H]
    whh1 = params["whh_l1"].T                                    # [H, 4H]
    b1 = (params["bih_l1"] + params["bhh_l1"]).reshape(1, 4 * H)

    # Layer 0: hoisted input projection (one big MXU matmul, gates stored narrow),
    # then recurrence only.
    g0 = _project(x_tm.reshape(T * B, D), wih0, b0,
                  out_dtype=gates_dtype, budget=budget).reshape(T, B, 4 * H)
    h0_seq, _ = _lstm_layer(g0, len2d, whh0, budget=budget, b_tile=b_tile)

    # Layer 1: same two-pass structure over the (time-major) layer-0 output sequence.
    # (Values at invalid timesteps are irrelevant: layer-1 state updates are masked.)
    # TODO(synk): on v5e, fuse this projection into the recurrence kernel to cut the
    # h0_seq/g1 HBM round trip (bandwidth-bound there).
    g1 = _project(h0_seq.reshape(T * B, H), wih1, b1,
                  out_dtype=gates_dtype, budget=budget).reshape(T, B, 4 * H)
    ctx_tm, hidden = _lstm_layer(g1, len2d, whh1, budget=budget, b_tile=b_tile)

    # Dropout (p=0.1) -> eval-mode identity.
    # TODO(synk): training-mode dropout (RNG-matched to PyTorch) is not reproduced.
    w_in = params["w_in"].T                                      # [H, H]
    w_out_T = params["w_out"].T                                  # [2H, H]
    w_out_a = w_out_T[:H]                                        # multiplies weighted_context
    w_out_b = w_out_T[H:]                                        # multiplies h
    w_lin = params["w_lin"].T                                    # [H, O]
    b_lin = params["b_lin"].reshape(1, -1)                       # [1, O]

    return _atten_classify(hidden, ctx_tm, len_row, w_in, w_out_a, w_out_b,
                           w_lin, b_lin, budget=budget)


def init_params(key, input_dim, hidden_dim, output_dim):
    H = hidden_dim
    keys = jax.random.split(key, 12)
    k = 1.0 / jnp.sqrt(jnp.float32(H))

    def u(kk, shape):
        return jax.random.uniform(kk, shape, jnp.float32, -k, k)

    return dict(
        wih_l0=u(keys[0], (4 * H, input_dim)),
        whh_l0=u(keys[1], (4 * H, H)),
        bih_l0=u(keys[2], (4 * H,)),
        bhh_l0=u(keys[3], (4 * H,)),
        wih_l1=u(keys[4], (4 * H, H)),
        whh_l1=u(keys[5], (4 * H, H)),
        bih_l1=u(keys[6], (4 * H,)),
        bhh_l1=u(keys[7], (4 * H,)),
        w_in=u(keys[8], (H, H)),                # SoftDotAttention.linear_in (no bias)
        w_out=u(keys[9], (H, 2 * H)),           # SoftDotAttention.linear_out (no bias)
        w_lin=u(keys[10], (output_dim, H)),     # final Linear
        b_lin=u(keys[11], (output_dim,)),
    )


def forward_ref(inputs, lengths, params):
    """Plain-JAX reference mirroring the PyTorch forward (eval-mode dropout)."""
    B, T, _ = inputs.shape
    H = params["whh_l0"].shape[1]

    def cell(x, h, c, wih, whh, b):
        g = x @ wih.T + h @ whh.T + b
        i = jax.nn.sigmoid(g[:, :H])
        f = jax.nn.sigmoid(g[:, H:2 * H])
        gg = jnp.tanh(g[:, 2 * H:3 * H])
        o = jax.nn.sigmoid(g[:, 3 * H:])
        c_new = f * c + i * gg
        return o * jnp.tanh(c_new), c_new

    b0 = params["bih_l0"] + params["bhh_l0"]
    b1 = params["bih_l1"] + params["bhh_l1"]
    h0 = c0 = h1 = c1 = jnp.zeros((B, H), jnp.float32)
    ctx_steps = []
    for t in range(T):
        valid = (lengths > t)[:, None]
        h0n, c0n = cell(inputs[:, t], h0, c0, params["wih_l0"], params["whh_l0"], b0)
        h0 = jnp.where(valid, h0n, h0)
        c0 = jnp.where(valid, c0n, c0)
        h1n, c1n = cell(h0, h1, c1, params["wih_l1"], params["whh_l1"], b1)
        h1 = jnp.where(valid, h1n, h1)
        c1 = jnp.where(valid, c1n, c1)
        ctx_steps.append(jnp.where(valid, h1n, 0.0))
    ctx = jnp.stack(ctx_steps, axis=1)
    hidden = h1

    target = hidden @ params["w_in"].T
    attn = jnp.sum(ctx * target[:, None, :], axis=2)
    mask = jnp.arange(T)[None, :] >= lengths[:, None]
    attn = jnp.where(mask, -jnp.inf, attn)
    p = jax.nn.softmax(attn, axis=1)
    weighted = jnp.sum(p[:, :, None] * ctx, axis=1)
    h_tilde = jnp.tanh(jnp.concatenate([weighted, hidden], axis=1) @ params["w_out"].T)
    return h_tilde @ params["w_lin"].T + params["b_lin"]


if __name__ == "__main__":
    B, T, D, H, O = 2, 16, 16, 32, 4
    key = jax.random.PRNGKey(0)
    pkey, xkey = jax.random.split(key)
    params = init_params(pkey, D, H, O)
    inputs = jax.random.normal(xkey, (B, T, D), jnp.float32)
    # pack_padded_sequence requires lengths sorted descending; lengths[0] == T.
    lengths = jnp.array([16, 11], dtype=jnp.int32)

    ref = forward_ref(inputs, lengths, params)

    # f32 gate storage: numerically conservative path, tight tolerance.
    out_f32 = lstm_classification_forward(inputs, lengths, params,
                                          gates_dtype=jnp.float32)
    jax.block_until_ready(out_f32)
    assert out_f32.shape == (B, O)
    assert jnp.allclose(out_f32, ref, atol=1e-4, rtol=1e-4), (out_f32, ref)

    # Default bf16 gate storage (halves HBM traffic of the dominant tensors);
    # tolerance loosened accordingly.
    out = lstm_classification_forward(inputs, lengths, params)
    jax.block_until_ready(out)
    assert out.shape == (B, O)
    assert jnp.allclose(out, ref, atol=2e-2, rtol=2e-2), (out, ref)

    print("KERNEL_OK")
</pallas_src>

<mosaic_0001>
module attributes {stable_mosaic.version = 11 : i64} {
  func.func @proj_kernel(%arg0: i32, %arg1: memref<32x16xf32, #tpu.memory_space<vmem>>, %arg2: memref<16x128xf32, #tpu.memory_space<vmem>>, %arg3: memref<1x128xf32, #tpu.memory_space<vmem>>, %arg4: memref<32x128xf32, #tpu.memory_space<vmem>>) attributes {dimension_semantics = [#tpu.dimension_semantics<parallel>], iteration_bounds = array<i64: 1>, scalar_prefetch = 0 : i64, scratch_operands = 0 : i64, tpu.core_type = #tpu.core_type<tc>, window_params = [{transform_indices = @transform_0, window_bounds = array<i64: 32, 16>}, {pipeline_mode = #tpu.pipeline_mode<synchronous>, transform_indices = @transform_1, window_bounds = array<i64: 16, 128>}, {pipeline_mode = #tpu.pipeline_mode<synchronous>, transform_indices = @transform_2, window_bounds = array<i64: 1, 128>}, {transform_indices = @transform_3, window_bounds = array<i64: 32, 128>}]} {
    %c0 = arith.constant 0 : index
    %c0_0 = arith.constant 0 : index
    %0 = vector.load %arg1[%c0, %c0_0] : memref<32x16xf32, #tpu.memory_space<vmem>>, vector<32x16xf32>
    %c0_1 = arith.constant 0 : index
    %c0_2 = arith.constant 0 : index
    %1 = vector.load %arg2[%c0_1, %c0_2] : memref<16x128xf32, #tpu.memory_space<vmem>>, vector<16x128xf32>
    %cst = arith.constant dense<0.000000e+00> : vector<32x128xf32>
    %2 = tpu.matmul %0, %1, %cst {dimension_numbers = #tpu.dot_dimension_numbers<[1], [0], [0], [1], [0, 0, 1, 1], [], []>} : vector<32x16xf32>, vector<16x128xf32>, vector<32x128xf32> -> vector<32x128xf32>
    %c0_3 = arith.constant 0 : index
    %c0_4 = arith.constant 0 : index
    %3 = vector.load %arg3[%c0_3, %c0_4] : memref<1x128xf32, #tpu.memory_space<vmem>>, vector<1x128xf32>
    %4 = vector.broadcast %3 : vector<1x128xf32> to vector<32x128xf32>
    %5 = arith.addf %2, %4 : vector<32x128xf32>
    %c0_5 = arith.constant 0 : index
    %c0_6 = arith.constant 0 : index
    %6 = vector.load %arg4[%c0_5, %c0_6] : memref<32x128xf32, #tpu.memory_space<vmem>>, vector<32x128xf32>
    tpu.vector_store %arg4[%c0_5, %c0_6], %5 {strides = array<i32>} : memref<32x128xf32, #tpu.memory_space<vmem>>, vector<32x128xf32>,
    return
  }
  func.func @transform_0(%arg0: i32) -> (i32, i32) {
    %c0_i32 = arith.constant 0 : i32
    %c0_i32_0 = arith.constant 0 : i32
    return %arg0, %c0_i32 : i32, i32
  }
  func.func @transform_1(%arg0: i32) -> (i32, i32) {
    %c0_i32 = arith.constant 0 : i32
    %c0_i32_0 = arith.constant 0 : i32
    %c0_i32_1 = arith.constant 0 : i32
    return %c0_i32, %c0_i32_0 : i32, i32
  }
  func.func @transform_2(%arg0: i32) -> (i32, i32) {
    %c0_i32 = arith.constant 0 : i32
    %c0_i32_0 = arith.constant 0 : i32
    %c0_i32_1 = arith.constant 0 : i32
    return %c0_i32, %c0_i32_0 : i32, i32
  }
  func.func @transform_3(%arg0: i32) -> (i32, i32) {
    %c0_i32 = arith.constant 0 : i32
    %c0_i32_0 = arith.constant 0 : i32
    return %arg0, %c0_i32 : i32, i32
  }
}

</mosaic_0001>

<llo_original>
// kernel: tpu_custom_call.1
$region0: #{tpu_custom_call.1}
  #allocation0 [shape = 'u32[]', space=smem, size = 0x4, offset = 0x4, fixed_abs, tag = 'smem constant byte address 0x4 - core index']
  #allocation1 [shape = 'u32[144,128]{1,0:T(1,128)}', space=vmem, size = 0x12000, scoped, tag = 'internal scratch']
  %s0 = inlined_call_operand.vmem [shape: f32[32,16], index: 0, kind: input, shape index: {}]
  %s1 = inlined_call_operand.vmem [shape: f32[16,128], index: 1, kind: input, shape index: {}]
  %s2 = inlined_call_operand.vmem [shape: f32[1,128], index: 2, kind: input, shape index: {}]
  %s3 = inlined_call_operand.hbm [shape: f32[32,128], index: 3, kind: output, shape index: {}]
  %s4 = sld [smem:[#allocation0]]
  $region22: #{tpu_custom_call.1} parent=0
    _
  %s6 = ssub.s32 1, %s4
  %s7 = scalar_select 0, %s6, %s4
  $region1: #{tpu_custom_call.1} parent=0
    #allocation2 [shape = 'u8[16384]{0}', space=vmem, size = 0x4000, scoped, tag = 'output window, operand 0, single buffered']
    #allocation3 [shape = 's32[1]{0}', space=sflag, size = 0x4, scoped, tag = 'scoped memory for tpu_custom_call.1']
    %8 = vsyncpa [#allocation3], 0
    // Predicated region
    $region2: #{tpu_custom_call.1} parent=1 // pred_check
      _
    $region3: #{tpu_custom_call.1} parent=1 // pred_check_branch
      %10 = sbr.rel (0) target = $region5
    $region4: #{tpu_custom_call.1} parent=1 // pred_region
      _
    $region5: #{tpu_custom_call.1} parent=1 // pred_fallthru
      _
    // Predicated region
    $region6: #{tpu_custom_call.1} parent=1 // pred_check
      _
    $region7: #{tpu_custom_call.1} parent=1 // pred_check_branch
      %12 = sbr.rel (0) target = $region9
    $region8: #{tpu_custom_call.1} parent=1 // pred_region
      _
    $region9: #{tpu_custom_call.1} parent=1 // pred_fallthru
      _
    // Predicated region
    $region10: #{tpu_custom_call.1} parent=1 // pred_check
      _
    $region11: #{tpu_custom_call.1} parent=1 // pred_check_branch
      %14 = sbr.rel (0) target = $region13
    $region12: #{tpu_custom_call.1} parent=1 // pred_region
      _
    $region13: #{tpu_custom_call.1} parent=1 // pred_fallthru
      _
    %v15 = vld [vmem:[%s0] sm:$0xff]
    %v16 = vld [vmem:[%s0 + $0x8] sm:$0xff]
    %v17 = vld [vmem:[%s0 + $0x10] sm:$0xff]
    %v18 = vld [vmem:[%s0 + $0x18] sm:$0xff]
    %v19 = vld [vmem:[%s1] sm:$0xff]
    %v20 = vld [vmem:[%s1 + $0x8] sm:$0xff]
    %v21 = vld [vmem:[%s2] sm:$0x1]
    %v23 = vlaneseq
    %v24 = vshrl.u32 %v23, 7
    %v25 = vsub.s32 0, %v24
    %v26 = vrot.slane %v21, %v25
    %vm28 = vcmask 130048
    %v30 = vsel %vm28, %v15, 0
    %v33 = vsel %vm28, %v16, 0
    %v36 = vsel %vm28, %v17, 0
    %v39 = vsel %vm28, %v18, 0
    %41 = vmatprep.subr.mxu0 0.0
    %42 = vmatpush1.msra.mxu0 %v19
    %43 = vmatprep.subr.mxu0 0.0
    %44 = vmatpush1.msra.mxu0 %v20
    %45 = vmatprep.subr.mxu0 0.0
    %46 = vmatpush1.msra.mxu0 0.0
    %47 = vmatprep.subr.mxu0 0.0
    %48 = vmatpush1.msra.mxu0 0.0
    %49 = vmatprep.subr.mxu0 0.0
    %50 = vmatpush1.msra.mxu0 0.0
    %51 = vmatprep.subr.mxu0 0.0
    %52 = vmatpush1.msra.mxu0 0.0
    %53 = vmatprep.subr.mxu0 0.0
    %54 = vmatpush1.msra.mxu0 0.0
    %55 = vmatprep.subr.mxu0 0.0
    %56 = vmatpush1.msra.mxu0 0.0
    %57 = vmatprep.subr.mxu0 0.0
    %58 = vmatpush1.msra.mxu0 0.0
    %59 = vmatprep.subr.mxu0 0.0
    %60 = vmatpush1.msra.mxu0 0.0
    %61 = vmatprep.subr.mxu0 0.0
    %62 = vmatpush1.msra.mxu0 0.0
    %63 = vmatprep.subr.mxu0 0.0
    %64 = vmatpush1.msra.mxu0 0.0
    %65 = vmatprep.subr.mxu0 0.0
    %66 = vmatpush1.msra.mxu0 0.0
    %67 = vmatprep.subr.mxu0 0.0
    %68 = vmatpush1.msra.mxu0 0.0
    %69 = vmatprep.subr.mxu0 0.0
    %70 = vmatpush1.msra.mxu0 0.0
    %71 = vmatprep.subr.mxu0 0.0
    %72 = vmatpush1.msra.mxu0 0.0
    %73 = vmatprep.subr.mxu0 0.0
    %74 = vmatpush1.msra.mxu0 0.0
    %75 = vmatprep.subr.mxu0 0.0
    %76 = vmatpush1.msra.mxu0 0.0
    %77 = vmatprep.subr.mxu0 0.0
    %78 = vmatpush1.msra.mxu0 0.0
    %79 = vmatprep.subr.mxu0 0.0
    %80 = vmatpush1.msra.mxu0 0.0
    %81 = vmatprep.subr.mxu0 0.0
    %82 = vmatpush1.msra.mxu0 0.0
    %83 = vmatprep.subr.mxu0 0.0
    %84 = vmatpush1.msra.mxu0 0.0
    %85 = vmatprep.subr.mxu0 0.0
    %86 = vmatpush1.msra.mxu0 0.0
    %87 = vmatprep.subr.mxu0 0.0
    %88 = vmatpush1.msra.mxu0 0.0
    %89 = vmatprep.subr.mxu0 0.0
    %90 = vmatpush1.msra.mxu0 0.0
    %91 = vmatprep.subr.mxu0 0.0
    %92 = vmatpush1.msra.mxu0 0.0
    %93 = vmatprep.subr.mxu0 0.0
    %94 = vmatpush1.msra.mxu0 0.0
    %95 = vmatprep.subr.mxu0 0.0
    %96 = vmatpush1.msra.mxu0 0.0
    %97 = vmatprep.subr.mxu0 0.0
    %98 = vmatpush1.msra.mxu0 0.0
    %99 = vmatprep.subr.mxu0 0.0
    %100 = vmatpush1.msra.mxu0 0.0
    %101 = vmatprep.subr.mxu0 0.0
    %102 = vmatpush1.msra.mxu0 0.0
    %103 = vmatprep.subr.mxu0 0.0
    %104 = vmatpush1.msra.mxu0 0.0
    %105 = vmatprep.mubr.f32.mxu0 0.0
    %106 = vmatmul.mubr.f32.gmra.mrb[0].mxu0 %v30
    %v107 = vpop.f32.mrb[0].mxu0
    %v108 = vadd.f32 %v26, %v107
    %v109 = vpop.f32.mrb[0].mxu0
    %110 = vmatprep.mubr.f32.mxu0 0.0
    %111 = vmatmul.mubr.f32.gmra.mrb[0].mxu0 %v33
    %v112 = vpop.f32.mrb[0].mxu0
    %v113 = vadd.f32 %v26, %v112
    %v114 = vpop.f32.mrb[0].mxu0
    %115 = vmatprep.mubr.f32.mxu0 0.0
    %116 = vmatmul.mubr.f32.gmra.mrb[0].mxu0 %v36
    %v117 = vpop.f32.mrb[0].mxu0
    %v118 = vadd.f32 %v26, %v117
    %v119 = vpop.f32.mrb[0].mxu0
    %120 = vmatprep.mubr.f32.mxu0 0.0
    %121 = vmatmul.mubr.f32.gmra.mrb[0].mxu0 %v39
    %v122 = vpop.f32.mrb[0].mxu0
    %v123 = vadd.f32 %v26, %v122
    %v124 = vpop.f32.mrb[0].mxu0
    %125 = vdwg.mxu0
    %126 = vst [vmem:[#allocation2] sm:$0xff] %v108
    %127 = vst [vmem:[#allocation2 + $0x8] sm:$0xff] %v113
    %128 = vst [vmem:[#allocation2 + $0x10] sm:$0xff] %v118
    %129 = vst [vmem:[#allocation2 + $0x18] sm:$0xff] %v123
    // Predicated region
    $region14: #{tpu_custom_call.1} parent=1 // pred_check
      _
    $region15: #{tpu_custom_call.1} parent=1 // pred_check_branch
      %131 = sbr.rel (0) target = $region17
    $region16: #{tpu_custom_call.1} parent=1 // pred_region
      %s133 = ssub.s32 512, 512
      %134 = vsyncadd [#allocation3], %s133
      %s135 = sshll.u32 [#allocation2], 4
      %s136 = int_to_ptr.vmem [resolvable:$true] %s135
      %141 = dma.vmem_to_hbm [thread:$0]  %s136, 512, %s3, [#allocation3], 128, 128, 8
    $region17: #{tpu_custom_call.1} parent=1 // pred_fallthru
      _
    // Predicated region
    $region18: #{tpu_custom_call.1} parent=1 // pred_check
      _
    $region19: #{tpu_custom_call.1} parent=1 // pred_check_branch
      %143 = sbr.rel (0) target = $region21
    $region20: #{tpu_custom_call.1} parent=1 // pred_region
      %144 = dma.done [#allocation3], 512
    $region21: #{tpu_custom_call.1} parent=1 // pred_fallthru
      _
    %145 = vsyncpa [#allocation3], 1

</llo_original>
